<compile_context>
chip_gen: v7x
topology: tpu7x:2x2x1
jax: 0.10.0
libtpu: 0.0.40
codegen_flags: <defaults>
</compile_context>

<pallas_src>
import functools

import jax
import jax.numpy as jnp
from jax.experimental import pallas as pl
from jax.experimental.pallas import tpu as pltpu

_NCORES = 2     # leading "parallel" grid axis (uses both v7x TensorCores)
_LANES = 128    # vreg lane width
_SUBS = 8       # f32 sublanes; hw is padded to a multiple of 8*128 = 1024


def _suf_partial_kernel(yp_ref, yt_ref, tp_ref, syt_ref, syp_ref, ce_ref, *,
                        gamma, epsilon, hw_true, sub_blocks, num_lane_tiles,
                        needs_mask):
    """One (core-half, lane-tile) grid step.

    yp_ref / yt_ref      : (rows_half, S, 128) input blocks in VMEM.
    tp/syt/syp/ce refs   : (rows_half, 1, 1) f32 output blocks.  Their block
                           index is constant along the lane-tile axis, so they
                           stay resident in VMEM and are used directly as
                           accumulators (init at tile 0).
    Accumulated quantities per row r (class = r % 2):
       tp  = sum(y_true * y_pred)
       syt = sum(y_true),  syp = sum(y_pred_clipped)
       ce  = sum((1 - y_pred)^gamma * y_true * log(y_pred))   (sign + delta
                                                               applied later)
    """
    i = pl.program_id(1)

    @pl.when(i == 0)
    def _init():
        tp_ref[...] = jnp.zeros_like(tp_ref)
        syt_ref[...] = jnp.zeros_like(syt_ref)
        syp_ref[...] = jnp.zeros_like(syp_ref)
        ce_ref[...] = jnp.zeros_like(ce_ref)

    def _rowsum(x):
        # (rows_half, S, 128) -> (rows_half, 1, 1), all intermediates >= 2-D.
        s = jnp.sum(x, axis=1, keepdims=True)
        return jnp.sum(s, axis=2, keepdims=True)

    def _accum(masked):
        yp = jnp.clip(yp_ref[...].astype(jnp.float32),
                      jnp.float32(epsilon), jnp.float32(1.0 - epsilon))
        yt = yt_ref[...].astype(jnp.float32)
        one_m = 1.0 - yp

        if gamma == 0.5:
            focal = jnp.sqrt(one_m)                 # single EUP op
        elif gamma == 0.0:
            focal = None                            # pow(x, 0) == 1
        elif gamma == 1.0:
            focal = one_m
        elif gamma == 2.0:
            focal = one_m * one_m
        else:
            focal = jnp.power(one_m, jnp.float32(gamma))   # generic fallback

        tp_t = yt * yp
        ce_t = yt * jnp.log(yp)                     # minus sign at finalize
        if focal is not None:
            ce_t = focal * ce_t
        yt_t = yt
        yp_t = yp

        if masked:
            # Only the last lane tile can reach indices >= hw_true (wrapper
            # padding and/or block overhang); mask them to zero.
            shape = yp.shape
            base = (num_lane_tiles - 1) * sub_blocks * _LANES
            sub = jax.lax.broadcasted_iota(jnp.int32, shape, 1)
            lane = jax.lax.broadcasted_iota(jnp.int32, shape, 2)
            valid = (base + sub * _LANES + lane) < hw_true
            zero = jnp.float32(0.0)
            tp_t = jnp.where(valid, tp_t, zero)
            ce_t = jnp.where(valid, ce_t, zero)
            yt_t = jnp.where(valid, yt_t, zero)
            yp_t = jnp.where(valid, yp_t, zero)

        tp_ref[...] += _rowsum(tp_t)
        syt_ref[...] += _rowsum(yt_t)
        syp_ref[...] += _rowsum(yp_t)
        ce_ref[...] += _rowsum(ce_t)

    if not needs_mask:
        _accum(False)
    elif num_lane_tiles == 1:
        _accum(True)
    else:
        @pl.when(i < num_lane_tiles - 1)
        def _fast():
            _accum(False)

        @pl.when(i == num_lane_tiles - 1)
        def _tail():
            _accum(True)


def symmetric_unified_focal_loss(y_pred, y_true, *, weight=0.5, delta=0.6,
                                 gamma=0.5, epsilon=1e-7,
                                 tile_sublane_blocks=None):
    """Pallas implementation of SymmetricUnifiedFocalLoss.forward.

    y_pred, y_true: (B, 2, H, W) arrays (NCHW, class axis = 1).
    Returns a scalar float32 loss.
    `tile_sublane_blocks` optionally overrides the lane-tile size (testing).
    """
    assert y_pred.shape == y_true.shape and y_pred.ndim == 4
    B, C, H, W = y_pred.shape
    assert C == 2, "SymmetricUnifiedFocalLoss assumes 2 classes (back/fore)."

    hw = H * W
    rows = B * C
    rows_half = rows // _NCORES          # rows = 2B is always even

    # Free contiguous reshape to (rows, hw); pad hw to a multiple of 1024 so
    # it re-views as (rows, hw_blocks, 128) with hw_blocks a multiple of 8
    # (no copy when H*W is already a multiple of 1024).
    pad_unit = _SUBS * _LANES
    hw_pad = -(-hw // pad_unit) * pad_unit
    yp2 = y_pred.reshape(rows, hw)
    yt2 = y_true.reshape(rows, hw)
    if hw_pad != hw:
        yp2 = jnp.pad(yp2, ((0, 0), (0, hw_pad - hw)))
        yt2 = jnp.pad(yt2, ((0, 0), (0, hw_pad - hw)))
    hw_blocks = hw_pad // _LANES
    yp3 = yp2.reshape(rows, hw_blocks, _LANES)
    yt3 = yt2.reshape(rows, hw_blocks, _LANES)

    in_bytes = yp3.dtype.itemsize + yt3.dtype.itemsize   # per element, both inputs

    # Generation-aware VMEM budget (v7x only has 64 MiB physical VMEM).
    try:
        vmem_cap = int(getattr(pltpu.get_tpu_info(), "vmem_capacity_bytes",
                               64 * 1024 * 1024))
    except Exception:  # no TPU info available at trace time
        vmem_cap = 64 * 1024 * 1024
    budget = min(vmem_cap // 4, 16 * 1024 * 1024)      # 2 inputs x 2 buffers
    vmem_limit = int(min(vmem_cap // 2, 64 * 1024 * 1024))

    if tile_sublane_blocks is None:
        s = budget // (2 * rows_half * _LANES * in_bytes)
        s = max(_SUBS, (s // _SUBS) * _SUBS)
    else:
        s = max(_SUBS, (int(tile_sublane_blocks) // _SUBS) * _SUBS)
    s = min(s, hw_blocks)
    num_tiles = -(-hw_blocks // s)
    needs_mask = (hw % (s * _LANES)) != 0

    kernel = functools.partial(
        _suf_partial_kernel,
        gamma=float(gamma), epsilon=float(epsilon),
        hw_true=hw, sub_blocks=s, num_lane_tiles=num_tiles,
        needs_mask=needs_mask)

    in_spec = pl.BlockSpec((rows_half, s, _LANES), lambda c, i: (c, i, 0))
    acc_spec = pl.BlockSpec((rows_half, 1, 1), lambda c, i: (c, 0, 0))
    grid_spec = pltpu.PrefetchScalarGridSpec(
        num_scalar_prefetch=0,
        grid=(_NCORES, num_tiles),
        in_specs=[in_spec, in_spec],
        out_specs=[acc_spec, acc_spec, acc_spec, acc_spec],
    )

    n_elem = rows * num_tiles * s * _LANES
    cost = pl.CostEstimate(
        flops=10 * n_elem,
        transcendentals=2 * n_elem,                 # log + sqrt per element
        bytes_accessed=n_elem * in_bytes + 4 * rows * 4)

    out_shape = tuple(jax.ShapeDtypeStruct((rows, 1, 1), jnp.float32)
                      for _ in range(4))
    tp, syt, syp, ce = pl.pallas_call(
        kernel,
        out_shape=out_shape,
        grid_spec=grid_spec,
        compiler_params=pltpu.CompilerParams(
            dimension_semantics=("parallel", "arbitrary"),
            vmem_limit_bytes=vmem_limit),
        cost_estimate=cost,
    )(yp3, yt3)

    # --- tiny finalize in plain JAX (exact reference formulas) -------------
    tp = tp.reshape(B, 2)
    syt = syt.reshape(B, 2)
    syp = syp.reshape(B, 2)
    ce = ce.reshape(B, 2)

    eps = jnp.float32(epsilon)
    # tp + delta*fn + (1-delta)*fp == delta*sum(yt) + (1-delta)*sum(yp)
    den = delta * syt + (1.0 - delta) * syp
    dice = (tp + eps) / (den + eps)
    back_dice = (1.0 - dice[:, 0]) * jnp.power(1.0 - dice[:, 0], -gamma)
    fore_dice = (1.0 - dice[:, 1]) * jnp.power(1.0 - dice[:, 1], -gamma)
    ftl = jnp.mean(jnp.stack([back_dice, fore_dice], axis=-1))

    # ce holds sum(focal * yt * log(yp)); the CE sums are its negation.
    back_ce = (1.0 - delta) * (-ce[:, 0])
    fore_ce = delta * (-ce[:, 1])
    fl = jnp.sum(back_ce + fore_ce) / jnp.float32(B * hw)

    if weight is None:
        return ftl + fl
    return jnp.float32(weight) * ftl + jnp.float32(1.0 - weight) * fl


def _reference_loss(y_pred, y_true, weight=0.5, delta=0.6, gamma=0.5,
                    epsilon=1e-7):
    """Pure-JAX replica of the PyTorch forward, for a correctness check."""
    yp = jnp.clip(y_pred, epsilon, 1.0 - epsilon)
    yt = y_true
    # Symmetric Focal Tversky
    tp = jnp.sum(yt * yp, axis=(2, 3))
    fn = jnp.sum(yt * (1 - yp), axis=(2, 3))
    fp = jnp.sum((1 - yt) * yp, axis=(2, 3))
    dice = (tp + epsilon) / (tp + delta * fn + (1 - delta) * fp + epsilon)
    back_dice = (1 - dice[:, 0]) * jnp.power(1 - dice[:, 0], -gamma)
    fore_dice = (1 - dice[:, 1]) * jnp.power(1 - dice[:, 1], -gamma)
    ftl = jnp.mean(jnp.stack([back_dice, fore_dice], axis=-1))
    # Symmetric Focal (CE)
    ce = -yt * jnp.log(yp)
    back_ce = (1 - delta) * jnp.power(1 - yp[:, 0], gamma) * ce[:, 0]
    fore_ce = delta * jnp.power(1 - yp[:, 1], gamma) * ce[:, 1]
    fl = jnp.mean(back_ce + fore_ce)
    if weight is None:
        return ftl + fl
    return weight * ftl + (1 - weight) * fl


if __name__ == "__main__":
    key = jax.random.PRNGKey(0)

    def run_case(B, H, W, **kw):
        k1, k2 = jax.random.split(jax.random.fold_in(key, B * 1000003 + H * W))
        # y_pred: softmax over the class axis -> valid probabilities.
        logits = jax.random.normal(k1, (B, 2, H, W), dtype=jnp.float32)
        y_pred = jax.nn.softmax(logits, axis=1)
        # y_true: one-hot labels over the 2 classes.
        labels = jax.random.randint(k2, (B, H, W), 0, 2)
        y_true = jax.nn.one_hot(labels, 2, axis=1, dtype=jnp.float32)

        loss = symmetric_unified_focal_loss(
            y_pred, y_true, weight=0.5, delta=0.6, gamma=0.5, **kw)
        loss = jax.block_until_ready(loss)
        ref = _reference_loss(y_pred, y_true, weight=0.5, delta=0.6, gamma=0.5)
        assert jnp.allclose(loss, ref, rtol=1e-5, atol=1e-5), (B, H, W, loss, ref)

    run_case(2, 16, 16)                           # masked single-tile path
    run_case(2, 64, 64)                           # unmasked single big tile
    run_case(2, 64, 64, tile_sublane_blocks=8)    # multi-tile accumulation
    run_case(3, 32, 36)                           # odd rows/core + pad + mask

    print("KERNEL_OK")
</pallas_src>

<mosaic_0001>
module attributes {stable_mosaic.version = 11 : i64} {
  func.func @_suf_partial_kernel(%arg0: i32, %arg1: i32, %arg2: memref<2x8x128xf32, #tpu.memory_space<vmem>>, %arg3: memref<2x8x128xf32, #tpu.memory_space<vmem>>, %arg4: memref<2x1x1xf32, #tpu.memory_space<vmem>>, %arg5: memref<2x1x1xf32, #tpu.memory_space<vmem>>, %arg6: memref<2x1x1xf32, #tpu.memory_space<vmem>>, %arg7: memref<2x1x1xf32, #tpu.memory_space<vmem>>) attributes {dimension_semantics = [#tpu.dimension_semantics<parallel>, #tpu.dimension_semantics<arbitrary>], iteration_bounds = array<i64: 2, 1>, scalar_prefetch = 0 : i64, scratch_operands = 0 : i64, tpu.core_type = #tpu.core_type<tc>, window_params = [{transform_indices = @transform_0, window_bounds = array<i64: 2, 8, 128>}, {transform_indices = @transform_1, window_bounds = array<i64: 2, 8, 128>}, {transform_indices = @transform_2, window_bounds = array<i64: 2, 1, 1>}, {transform_indices = @transform_3, window_bounds = array<i64: 2, 1, 1>}, {transform_indices = @transform_4, window_bounds = array<i64: 2, 1, 1>}, {transform_indices = @transform_5, window_bounds = array<i64: 2, 1, 1>}]} {
    %c0_i32 = arith.constant 0 : i32
    %0 = arith.cmpi eq, %arg1, %c0_i32 : i32
    %1 = arith.extui %0 : i1 to i32
    %c0_i32_0 = arith.constant 0 : i32
    %2 = arith.cmpi ne, %1, %c0_i32_0 : i32
    scf.if %2 {
      %cst_45 = arith.constant 0.000000e+00 : f32
      %61 = vector.broadcast %cst_45 : f32 to vector<2x1x1xf32>
      %c0_46 = arith.constant 0 : index
      %c0_47 = arith.constant 0 : index
      %c0_48 = arith.constant 0 : index
      %62 = vector.load %arg4[%c0_46, %c0_47, %c0_48] : memref<2x1x1xf32, #tpu.memory_space<vmem>>, vector<2x1x1xf32>
      tpu.vector_store %arg4[%c0_46, %c0_47, %c0_48], %61 {strides = array<i32>} : memref<2x1x1xf32, #tpu.memory_space<vmem>>, vector<2x1x1xf32>,
      %cst_49 = arith.constant 0.000000e+00 : f32
      %63 = vector.broadcast %cst_49 : f32 to vector<2x1x1xf32>
      %c0_50 = arith.constant 0 : index
      %c0_51 = arith.constant 0 : index
      %c0_52 = arith.constant 0 : index
      %64 = vector.load %arg5[%c0_50, %c0_51, %c0_52] : memref<2x1x1xf32, #tpu.memory_space<vmem>>, vector<2x1x1xf32>
      tpu.vector_store %arg5[%c0_50, %c0_51, %c0_52], %63 {strides = array<i32>} : memref<2x1x1xf32, #tpu.memory_space<vmem>>, vector<2x1x1xf32>,
      %cst_53 = arith.constant 0.000000e+00 : f32
      %65 = vector.broadcast %cst_53 : f32 to vector<2x1x1xf32>
      %c0_54 = arith.constant 0 : index
      %c0_55 = arith.constant 0 : index
      %c0_56 = arith.constant 0 : index
      %66 = vector.load %arg6[%c0_54, %c0_55, %c0_56] : memref<2x1x1xf32, #tpu.memory_space<vmem>>, vector<2x1x1xf32>
      tpu.vector_store %arg6[%c0_54, %c0_55, %c0_56], %65 {strides = array<i32>} : memref<2x1x1xf32, #tpu.memory_space<vmem>>, vector<2x1x1xf32>,
      %cst_57 = arith.constant 0.000000e+00 : f32
      %67 = vector.broadcast %cst_57 : f32 to vector<2x1x1xf32>
      %c0_58 = arith.constant 0 : index
      %c0_59 = arith.constant 0 : index
      %c0_60 = arith.constant 0 : index
      %68 = vector.load %arg7[%c0_58, %c0_59, %c0_60] : memref<2x1x1xf32, #tpu.memory_space<vmem>>, vector<2x1x1xf32>
      tpu.vector_store %arg7[%c0_58, %c0_59, %c0_60], %67 {strides = array<i32>} : memref<2x1x1xf32, #tpu.memory_space<vmem>>, vector<2x1x1xf32>,
    } else {
    }
    %c0 = arith.constant 0 : index
    %c0_1 = arith.constant 0 : index
    %c0_2 = arith.constant 0 : index
    %3 = vector.load %arg2[%c0, %c0_1, %c0_2] : memref<2x8x128xf32, #tpu.memory_space<vmem>>, vector<2x8x128xf32>
    %cst = arith.constant 1.000000e-07 : f32
    %cst_3 = arith.constant 0.99999988 : f32
    %4 = vector.broadcast %cst : f32 to vector<2x8x128xf32>
    %5 = arith.maximumf %4, %3 : vector<2x8x128xf32>
    %6 = vector.broadcast %cst_3 : f32 to vector<2x8x128xf32>
    %7 = arith.minimumf %6, %5 : vector<2x8x128xf32>
    %c0_4 = arith.constant 0 : index
    %c0_5 = arith.constant 0 : index
    %c0_6 = arith.constant 0 : index
    %8 = vector.load %arg3[%c0_4, %c0_5, %c0_6] : memref<2x8x128xf32, #tpu.memory_space<vmem>>, vector<2x8x128xf32>
    %cst_7 = arith.constant 1.000000e+00 : f32
    %9 = vector.broadcast %cst_7 : f32 to vector<2x8x128xf32>
    %10 = arith.subf %9, %7 : vector<2x8x128xf32>
    %11 = math.sqrt %10 : vector<2x8x128xf32>
    %12 = arith.mulf %8, %7 : vector<2x8x128xf32>
    %13 = math.log %7 : vector<2x8x128xf32>
    %14 = arith.mulf %8, %13 : vector<2x8x128xf32>
    %15 = arith.mulf %11, %14 : vector<2x8x128xf32>
    %16 = tpu.iota {dimensions = array<i32: 1>} : vector<2x8x128xi32>
    %17 = tpu.iota {dimensions = array<i32: 2>} : vector<2x8x128xi32>
    %c128_i32 = arith.constant 128 : i32
    %18 = vector.broadcast %c128_i32 : i32 to vector<2x8x128xi32>
    %19 = arith.muli %16, %18 : vector<2x8x128xi32>
    %c0_i32_8 = arith.constant 0 : i32
    %20 = vector.broadcast %c0_i32_8 : i32 to vector<2x8x128xi32>
    %21 = arith.addi %20, %19 : vector<2x8x128xi32>
    %22 = arith.addi %21, %17 : vector<2x8x128xi32>
    %c256_i32 = arith.constant 256 : i32
    %23 = vector.broadcast %c256_i32 : i32 to vector<2x8x128xi32>
    %24 = arith.cmpi slt, %22, %23 : vector<2x8x128xi32>
    %cst_9 = arith.constant 0.000000e+00 : f32
    %25 = vector.broadcast %cst_9 : f32 to vector<2x8x128xf32>
    %26 = arith.select %24, %12, %25 : vector<2x8x128xi1>, vector<2x8x128xf32>
    %cst_10 = arith.constant 0.000000e+00 : f32
    %27 = vector.broadcast %cst_10 : f32 to vector<2x8x128xf32>
    %28 = arith.select %24, %15, %27 : vector<2x8x128xi1>, vector<2x8x128xf32>
    %cst_11 = arith.constant 0.000000e+00 : f32
    %29 = vector.broadcast %cst_11 : f32 to vector<2x8x128xf32>
    %30 = arith.select %24, %8, %29 : vector<2x8x128xi1>, vector<2x8x128xf32>
    %cst_12 = arith.constant 0.000000e+00 : f32
    %31 = vector.broadcast %cst_12 : f32 to vector<2x8x128xf32>
    %32 = arith.select %24, %7, %31 : vector<2x8x128xi1>, vector<2x8x128xf32>
    %c0_13 = arith.constant 0 : index
    %c0_14 = arith.constant 0 : index
    %c0_15 = arith.constant 0 : index
    %33 = vector.load %arg4[%c0_13, %c0_14, %c0_15] : memref<2x1x1xf32, #tpu.memory_space<vmem>>, vector<2x1x1xf32>
    %cst_16 = arith.constant dense<0.000000e+00> : vector<2x128xf32>
    %34 = vector.multi_reduction <add>, %26, %cst_16 [1] : vector<2x8x128xf32> to vector<2x128xf32>
    %35 = vector.shape_cast %34 : vector<2x128xf32> to vector<2x1x128xf32>
    %cst_17 = arith.constant dense<0.000000e+00> : vector<2x1xf32>
    %36 = vector.multi_reduction <add>, %35, %cst_17 [2] : vector<2x1x128xf32> to vector<2x1xf32>
    %37 = vector.shape_cast %36 : vector<2x1xf32> to vector<2x1x1xf32>
    %38 = arith.addf %33, %37 : vector<2x1x1xf32>
    %c0_18 = arith.constant 0 : index
    %c0_19 = arith.constant 0 : index
    %c0_20 = arith.constant 0 : index
    %39 = vector.load %arg4[%c0_18, %c0_19, %c0_20] : memref<2x1x1xf32, #tpu.memory_space<vmem>>, vector<2x1x1xf32>
    tpu.vector_store %arg4[%c0_18, %c0_19, %c0_20], %38 {strides = array<i32>} : memref<2x1x1xf32, #tpu.memory_space<vmem>>, vector<2x1x1xf32>,
    %c0_21 = arith.constant 0 : index
    %c0_22 = arith.constant 0 : index
    %c0_23 = arith.constant 0 : index
    %40 = vector.load %arg5[%c0_21, %c0_22, %c0_23] : memref<2x1x1xf32, #tpu.memory_space<vmem>>, vector<2x1x1xf32>
    %cst_24 = arith.constant dense<0.000000e+00> : vector<2x128xf32>
    %41 = vector.multi_reduction <add>, %30, %cst_24 [1] : vector<2x8x128xf32> to vector<2x128xf32>
    %42 = vector.shape_cast %41 : vector<2x128xf32> to vector<2x1x128xf32>
    %cst_25 = arith.constant dense<0.000000e+00> : vector<2x1xf32>
    %43 = vector.multi_reduction <add>, %42, %cst_25 [2] : vector<2x1x128xf32> to vector<2x1xf32>
    %44 = vector.shape_cast %43 : vector<2x1xf32> to vector<2x1x1xf32>
    %45 = arith.addf %40, %44 : vector<2x1x1xf32>
    %c0_26 = arith.constant 0 : index
    %c0_27 = arith.constant 0 : index
    %c0_28 = arith.constant 0 : index
    %46 = vector.load %arg5[%c0_26, %c0_27, %c0_28] : memref<2x1x1xf32, #tpu.memory_space<vmem>>, vector<2x1x1xf32>
    tpu.vector_store %arg5[%c0_26, %c0_27, %c0_28], %45 {strides = array<i32>} : memref<2x1x1xf32, #tpu.memory_space<vmem>>, vector<2x1x1xf32>,
    %c0_29 = arith.constant 0 : index
    %c0_30 = arith.constant 0 : index
    %c0_31 = arith.constant 0 : index
    %47 = vector.load %arg6[%c0_29, %c0_30, %c0_31] : memref<2x1x1xf32, #tpu.memory_space<vmem>>, vector<2x1x1xf32>
    %cst_32 = arith.constant dense<0.000000e+00> : vector<2x128xf32>
    %48 = vector.multi_reduction <add>, %32, %cst_32 [1] : vector<2x8x128xf32> to vector<2x128xf32>
    %49 = vector.shape_cast %48 : vector<2x128xf32> to vector<2x1x128xf32>
    %cst_33 = arith.constant dense<0.000000e+00> : vector<2x1xf32>
    %50 = vector.multi_reduction <add>, %49, %cst_33 [2] : vector<2x1x128xf32> to vector<2x1xf32>
    %51 = vector.shape_cast %50 : vector<2x1xf32> to vector<2x1x1xf32>
    %52 = arith.addf %47, %51 : vector<2x1x1xf32>
    %c0_34 = arith.constant 0 : index
    %c0_35 = arith.constant 0 : index
    %c0_36 = arith.constant 0 : index
    %53 = vector.load %arg6[%c0_34, %c0_35, %c0_36] : memref<2x1x1xf32, #tpu.memory_space<vmem>>, vector<2x1x1xf32>
    tpu.vector_store %arg6[%c0_34, %c0_35, %c0_36], %52 {strides = array<i32>} : memref<2x1x1xf32, #tpu.memory_space<vmem>>, vector<2x1x1xf32>,
    %c0_37 = arith.constant 0 : index
    %c0_38 = arith.constant 0 : index
    %c0_39 = arith.constant 0 : index
    %54 = vector.load %arg7[%c0_37, %c0_38, %c0_39] : memref<2x1x1xf32, #tpu.memory_space<vmem>>, vector<2x1x1xf32>
    %cst_40 = arith.constant dense<0.000000e+00> : vector<2x128xf32>
    %55 = vector.multi_reduction <add>, %28, %cst_40 [1] : vector<2x8x128xf32> to vector<2x128xf32>
    %56 = vector.shape_cast %55 : vector<2x128xf32> to vector<2x1x128xf32>
    %cst_41 = arith.constant dense<0.000000e+00> : vector<2x1xf32>
    %57 = vector.multi_reduction <add>, %56, %cst_41 [2] : vector<2x1x128xf32> to vector<2x1xf32>
    %58 = vector.shape_cast %57 : vector<2x1xf32> to vector<2x1x1xf32>
    %59 = arith.addf %54, %58 : vector<2x1x1xf32>
    %c0_42 = arith.constant 0 : index
    %c0_43 = arith.constant 0 : index
    %c0_44 = arith.constant 0 : index
    %60 = vector.load %arg7[%c0_42, %c0_43, %c0_44] : memref<2x1x1xf32, #tpu.memory_space<vmem>>, vector<2x1x1xf32>
    tpu.vector_store %arg7[%c0_42, %c0_43, %c0_44], %59 {strides = array<i32>} : memref<2x1x1xf32, #tpu.memory_space<vmem>>, vector<2x1x1xf32>,
    return
  }
  func.func @transform_0(%arg0: i32, %arg1: i32) -> (i32, i32, i32) {
    %c0_i32 = arith.constant 0 : i32
    %c0_i32_0 = arith.constant 0 : i32
    return %arg0, %arg1, %c0_i32 : i32, i32, i32
  }
  func.func @transform_1(%arg0: i32, %arg1: i32) -> (i32, i32, i32) {
    %c0_i32 = arith.constant 0 : i32
    %c0_i32_0 = arith.constant 0 : i32
    return %arg0, %arg1, %c0_i32 : i32, i32, i32
  }
  func.func @transform_2(%arg0: i32, %arg1: i32) -> (i32, i32, i32) {
    %c0_i32 = arith.constant 0 : i32
    %c0_i32_0 = arith.constant 0 : i32
    %c0_i32_1 = arith.constant 0 : i32
    return %arg0, %c0_i32, %c0_i32_0 : i32, i32, i32
  }
  func.func @transform_3(%arg0: i32, %arg1: i32) -> (i32, i32, i32) {
    %c0_i32 = arith.constant 0 : i32
    %c0_i32_0 = arith.constant 0 : i32
    %c0_i32_1 = arith.constant 0 : i32
    return %arg0, %c0_i32, %c0_i32_0 : i32, i32, i32
  }
  func.func @transform_4(%arg0: i32, %arg1: i32) -> (i32, i32, i32) {
    %c0_i32 = arith.constant 0 : i32
    %c0_i32_0 = arith.constant 0 : i32
    %c0_i32_1 = arith.constant 0 : i32
    return %arg0, %c0_i32, %c0_i32_0 : i32, i32, i32
  }
  func.func @transform_5(%arg0: i32, %arg1: i32) -> (i32, i32, i32) {
    %c0_i32 = arith.constant 0 : i32
    %c0_i32_0 = arith.constant 0 : i32
    %c0_i32_1 = arith.constant 0 : i32
    return %arg0, %c0_i32, %c0_i32_0 : i32, i32, i32
  }
}

</mosaic_0001>

<llo_original>
// kernel: tpu_custom_call.1
$region0: #{tpu_custom_call.1}
  #allocation0 [shape = 'u32[]', space=smem, size = 0x4, offset = 0x4, fixed_abs, tag = 'smem constant byte address 0x4 - core index']
  #allocation1 [shape = 'u32[144,128]{1,0:T(1,128)}', space=vmem, size = 0x12000, scoped, tag = 'internal scratch']
  %s0 = inlined_call_operand.hbm [shape: f32[4,8,128], index: 0, kind: input, shape index: {}]
  %s1 = inlined_call_operand.hbm [shape: f32[4,8,128], index: 1, kind: input, shape index: {}]
  %s2 = inlined_call_operand.vmem [shape: f32[4,1,1], index: 2, kind: output, shape index: {0}]
  %s3 = inlined_call_operand.vmem [shape: f32[4,1,1], index: 3, kind: output, shape index: {1}]
  %s4 = inlined_call_operand.vmem [shape: f32[4,1,1], index: 4, kind: output, shape index: {2}]
  %s5 = inlined_call_operand.vmem [shape: f32[4,1,1], index: 5, kind: output, shape index: {3}]
  %6 = xla_tuple %s2, %s3, %s4, %s5
  %s7 = sld [smem:[#allocation0]]
  $region77: #{tpu_custom_call.1} parent=0
    _
  %s9 = ssub.s32 1, %s7
  %s10 = scalar_select 0, %s9, %s7
  $region1: #{tpu_custom_call.1} parent=0
    #allocation2 [shape = 'u8[16384]{0}', space=vmem, size = 0x4000, scoped, tag = 'input window, operand 0']
    #allocation3 [shape = 's32[2]{0}', space=sflag, size = 0x8, scoped, tag = 'scoped memory for tpu_custom_call.1']
    #allocation4 [shape = 'u8[16384]{0}', space=vmem, size = 0x4000, scoped, tag = 'input window, operand 1']
    #allocation5 [shape = 's32[2]{0}', space=sflag, size = 0x8, scoped, tag = 'scoped memory for tpu_custom_call.1']
    %11 = vsyncpa [#allocation3], 0
    %s12 = scalar_lea.sflag [#allocation3], 1
    %13 = vsyncpa %s12, 0
    %14 = vsyncpa [#allocation5], 0
    %s15 = scalar_lea.sflag [#allocation5], 1
    %16 = vsyncpa %s15, 0
    loop: start=0, step=1, limit=4
    $region2: #{tpu_custom_call.1} parent=1 // loop_pre_header
      _
    $region3: #{tpu_custom_call.1} parent=1 // loop_header
      %s18 = sphi 0, %s22
      %p19 = scmp.ge.s32.totalorder %s18, 4
      %s25 = sphi 0, %s37
      %s26 = sphi 0, %s33
      %s27 = sphi 0, %s25
      %s28 = sphi 0, %s26
      %s29 = sphi 0, %s27
      %s30 = sphi 0, %s28
      %s42 = sphi 0, %s44
      %s45 = sphi 0, %s42
      %s46 = sphi 0, %s45
      %s62 = sphi 0, %s46
      %s70 = sphi 0, %s72
      %s73 = sphi 0, %s70
      %s74 = sphi 0, %s73
      %s90 = sphi 0, %s74
      %s96 = sphi 0, %s98
      %s99 = sphi 0, %s96
      %s100 = sphi 0, %s99
      %s116 = sphi 0, %s100
      %s122 = sphi 0, %s124
      %s125 = sphi 0, %s122
      %s126 = sphi 0, %s125
      %s142 = sphi 0, %s126
      %s148 = sphi 0, %s150
      %s151 = sphi 0, %s148
      %s152 = sphi 0, %s151
      %s168 = sphi 0, %s152
      %s174 = sphi 0, %s176
      %s177 = sphi 0, %s174
      %s178 = sphi 0, %s177
      %s194 = sphi 0, %s178
    $region4: #{tpu_custom_call.1} parent=1 // loop_header_branch
      %21 = sbr.rel (%p19) target = $region8
    $region5: #{tpu_custom_call.1} parent=1 // loop_body
      %s23 = ssub.s32 %s18, 1
      %s24 = ssub.s32 %s18, 2
      %s31 = sadd.s32 1, %s26
      %p32 = scmp.ge.s32.totalorder %s31, 1
      %s33 = scalar_select %p32, 0, %s31
      %s34 = sadd.s32 1, %s25
      %s35 = scalar_select %p32, %s34, %s25
      %p36 = scmp.ge.s32.totalorder %s35, 2
      %s37 = scalar_select %p36, 0, %s35
      %s38 = ssub.s32 %s25, %s37
      %s39 = ssub.s32 %s26, %s33
      %s40 = sor.u32 %s38, %s39
      %p41 = scmp.eq.s32.totalorder %s40, 0
      %s43 = sadd.s32 %s42, 1
      %s44 = scalar_select %p41, %s42, %s43
      %p47 = pneg %p41
      %p48 = scmp.eq.s32.totalorder %s18, 1
      %p49 = por %p47, %p48
      %p50 = scmp.ne.s32.totalorder %s42, %s45
      %p51 = scmp.eq.s32.totalorder %s18, 0
      %p52 = por %p50, %p51
      %p53 = scmp.ne.s32.totalorder %s42, %s45
      %p54 = scmp.eq.s32.totalorder %s23, 1
      %p55 = por %p53, %p54
      %p56 = scmp.ne.s32.totalorder %s45, %s46
      %p57 = scmp.eq.s32.totalorder %s23, 0
      %p58 = por %p56, %p57
      %p59 = scmp.ne.s32.totalorder %s45, %s46
      %p60 = scmp.eq.s32.totalorder %s24, 1
      %p61 = por %p59, %p60
      %p63 = scmp.ne.s32.totalorder %s46, %s62
      %p64 = scmp.eq.s32.totalorder %s24, 0
      %p65 = por %p63, %p64
      %s66 = ssub.s32 %s25, %s37
      %s67 = ssub.s32 %s26, %s33
      %s68 = sor.u32 %s66, %s67
      %p69 = scmp.eq.s32.totalorder %s68, 0
      %s71 = sadd.s32 %s70, 1
      %s72 = scalar_select %p69, %s70, %s71
      %p75 = pneg %p69
      %p76 = scmp.eq.s32.totalorder %s18, 1
      %p77 = por %p75, %p76
      %p78 = scmp.ne.s32.totalorder %s70, %s73
      %p79 = scmp.eq.s32.totalorder %s18, 0
      %p80 = por %p78, %p79
      %p81 = scmp.ne.s32.totalorder %s70, %s73
      %p82 = scmp.eq.s32.totalorder %s23, 1
      %p83 = por %p81, %p82
      %p84 = scmp.ne.s32.totalorder %s73, %s74
      %p85 = scmp.eq.s32.totalorder %s23, 0
      %p86 = por %p84, %p85
      %p87 = scmp.ne.s32.totalorder %s73, %s74
      %p88 = scmp.eq.s32.totalorder %s24, 1
      %p89 = por %p87, %p88
      %p91 = scmp.ne.s32.totalorder %s74, %s90
      %p92 = scmp.eq.s32.totalorder %s24, 0
      %p93 = por %p91, %p92
      %s94 = ssub.s32 %s25, %s37
      %p95 = scmp.eq.s32.totalorder %s94, 0
      %s97 = sadd.s32 %s96, 1
      %s98 = scalar_select %p95, %s96, %s97
      %p101 = pneg %p95
      %p102 = scmp.eq.s32.totalorder %s18, 1
      %p103 = por %p101, %p102
      %p104 = scmp.ne.s32.totalorder %s96, %s99
      %p105 = scmp.eq.s32.totalorder %s18, 0
      %p106 = por %p104, %p105
      %p107 = scmp.ne.s32.totalorder %s96, %s99
      %p108 = scmp.eq.s32.totalorder %s23, 1
      %p109 = por %p107, %p108
      %p110 = scmp.ne.s32.totalorder %s99, %s100
      %p111 = scmp.eq.s32.totalorder %s23, 0
      %p112 = por %p110, %p111
      %p113 = scmp.ne.s32.totalorder %s99, %s100
      %p114 = scmp.eq.s32.totalorder %s24, 1
      %p115 = por %p113, %p114
      %p117 = scmp.ne.s32.totalorder %s100, %s116
      %p118 = scmp.eq.s32.totalorder %s24, 0
      %p119 = por %p117, %p118
      %s120 = ssub.s32 %s25, %s37
      %p121 = scmp.eq.s32.totalorder %s120, 0
      %s123 = sadd.s32 %s122, 1
      %s124 = scalar_select %p121, %s122, %s123
      %p127 = pneg %p121
      %p128 = scmp.eq.s32.totalorder %s18, 1
      %p129 = por %p127, %p128
      %p130 = scmp.ne.s32.totalorder %s122, %s125
      %p131 = scmp.eq.s32.totalorder %s18, 0
      %p132 = por %p130, %p131
      %p133 = scmp.ne.s32.totalorder %s122, %s125
      %p134 = scmp.eq.s32.totalorder %s23, 1
      %p135 = por %p133, %p134
      %p136 = scmp.ne.s32.totalorder %s125, %s126
      %p137 = scmp.eq.s32.totalorder %s23, 0
      %p138 = por %p136, %p137
      %p139 = scmp.ne.s32.totalorder %s125, %s126
      %p140 = scmp.eq.s32.totalorder %s24, 1
      %p141 = por %p139, %p140
      %p143 = scmp.ne.s32.totalorder %s126, %s142
      %p144 = scmp.eq.s32.totalorder %s24, 0
      %p145 = por %p143, %p144
      %s146 = ssub.s32 %s25, %s37
      %p147 = scmp.eq.s32.totalorder %s146, 0
      %s149 = sadd.s32 %s148, 1
      %s150 = scalar_select %p147, %s148, %s149
      %p153 = pneg %p147
      %p154 = scmp.eq.s32.totalorder %s18, 1
      %p155 = por %p153, %p154
      %p156 = scmp.ne.s32.totalorder %s148, %s151
      %p157 = scmp.eq.s32.totalorder %s18, 0
      %p158 = por %p156, %p157
      %p159 = scmp.ne.s32.totalorder %s148, %s151
      %p160 = scmp.eq.s32.totalorder %s23, 1
      %p161 = por %p159, %p160
      %p162 = scmp.ne.s32.totalorder %s151, %s152
      %p163 = scmp.eq.s32.totalorder %s23, 0
      %p164 = por %p162, %p163
      %p165 = scmp.ne.s32.totalorder %s151, %s152
      %p166 = scmp.eq.s32.totalorder %s24, 1
      %p167 = por %p165, %p166
      %p169 = scmp.ne.s32.totalorder %s152, %s168
      %p170 = scmp.eq.s32.totalorder %s24, 0
      %p171 = por %p169, %p170
      %s172 = ssub.s32 %s25, %s37
      %p173 = scmp.eq.s32.totalorder %s172, 0
      %s175 = sadd.s32 %s174, 1
      %s176 = scalar_select %p173, %s174, %s175
      %p179 = pneg %p173
      %p180 = scmp.eq.s32.totalorder %s18, 1
      %p181 = por %p179, %p180
      %p182 = scmp.ne.s32.totalorder %s174, %s177
      %p183 = scmp.eq.s32.totalorder %s18, 0
      %p184 = por %p182, %p183
      %p185 = scmp.ne.s32.totalorder %s174, %s177
      %p186 = scmp.eq.s32.totalorder %s23, 1
      %p187 = por %p185, %p186
      %p188 = scmp.ne.s32.totalorder %s177, %s178
      %p189 = scmp.eq.s32.totalorder %s23, 0
      %p190 = por %p188, %p189
      %p191 = scmp.ne.s32.totalorder %s177, %s178
      %p192 = scmp.eq.s32.totalorder %s24, 1
      %p193 = por %p191, %p192
      %p195 = scmp.ne.s32.totalorder %s178, %s194
      %p196 = scmp.eq.s32.totalorder %s24, 0
      %p197 = por %p195, %p196
      %p198 = scmp.le.s32.totalorder 1, %s18
      %p199 = scmp.lt.s32.totalorder %s18, 3
      %p200 = pnand %p198, %p199
      %p201 = pneg %p200
      // Predicated region
      $region9: #{tpu_custom_call.1} parent=5 // pred_check
        _
      $region10: #{tpu_custom_call.1} parent=5 // pred_check_branch
        %203 = sbr.rel (%p200) target = $region12
      $region11: #{tpu_custom_call.1} parent=5 // pred_region
        %s204 = ssub.s32 %s18, 1
      $region12: #{tpu_custom_call.1} parent=5 // pred_fallthru
        _
      %p205 = scmp.lt.s32.totalorder %s18, 2
      // Predicated region
      $region13: #{tpu_custom_call.1} parent=5 // pred_check
        %p206 = pneg %p205
      $region14: #{tpu_custom_call.1} parent=5 // pred_check_branch
        %208 = sbr.rel (%p206) target = $region16
      $region15: #{tpu_custom_call.1} parent=5 // pred_region
        // Predicated region
        $region17: #{tpu_custom_call.1} parent=15 // pred_check
          %p209 = pneg %p52
        $region18: #{tpu_custom_call.1} parent=15 // pred_check_branch
          %211 = sbr.rel (%p209) target = $region20
        $region19: #{tpu_custom_call.1} parent=15 // pred_region
          %s212 = sand.u32 %s42, 1
          %s213 = scalar_lea.sflag [#allocation3], %s212
          %s214 = sand.u32 %s42, 1
          %s215 = smul.addr %s214, 16
          %s216 = scalar_lea.vmem [#allocation2], %s215
          %s217 = smul.u32 2, %s25
          %s219 = ssub.s32 256, 256
          %220 = vsyncadd %s213, %s219
          %s221 = sadd.s32 %s26, %s217
          %s222 = smul.addr %s221, 128
          %s223 = scalar_lea.hbm %s0, %s222
          %s224 = sshll.u32 %s216, 4
          %s225 = int_to_ptr.vmem [resolvable:$true] %s224
          %230 = dma.hbm_to_vmem [thread:$0]  %s223, 256, %s225, %s213, 128, 128, 8
        $region20: #{tpu_custom_call.1} parent=15 // pred_fallthru
          _
        // Predicated region
        $region21: #{tpu_custom_call.1} parent=15 // pred_check
          %p231 = pneg %p80
        $region22: #{tpu_custom_call.1} parent=15 // pred_check_branch
          %233 = sbr.rel (%p231) target = $region24
        $region23: #{tpu_custom_call.1} parent=15 // pred_region
          %s234 = sand.u32 %s70, 1
          %s235 = scalar_lea.sflag [#allocation5], %s234
          %s236 = sand.u32 %s70, 1
          %s237 = smul.addr %s236, 16
          %s238 = scalar_lea.vmem [#allocation4], %s237
          %s239 = smul.u32 2, %s25
          %s241 = ssub.s32 256, 256
          %242 = vsyncadd %s235, %s241
          %s243 = sadd.s32 %s26, %s239
          %s244 = smul.addr %s243, 128
          %s245 = scalar_lea.hbm %s1, %s244
          %s246 = sshll.u32 %s238, 4
          %s247 = int_to_ptr.vmem [resolvable:$true] %s246
          %252 = dma.hbm_to_vmem [thread:$0]  %s245, 256, %s247, %s235, 128, 128, 8
        $region24: #{tpu_custom_call.1} parent=15 // pred_fallthru
          _
      $region16: #{tpu_custom_call.1} parent=5 // pred_fallthru
        _
      %p253 = scmp.le.s32.totalorder 1, %s18
      %p254 = scmp.lt.s32.totalorder %s18, 3
      %p255 = pnand %p253, %p254
      %p256 = pneg %p255
      // Predicated region
      $region25: #{tpu_custom_call.1} parent=5 // pred_check
        _
      $region26: #{tpu_custom_call.1} parent=5 // pred_check_branch
        %258 = sbr.rel (%p255) target = $region28
      $region27: #{tpu_custom_call.1} parent=5 // pred_region
        %s259 = ssub.s32 %s18, 1
        %s260 = sand.u32 %s45, 1
        %s261 = scalar_lea.sflag [#allocation3], %s260
        %s262 = sand.u32 %s45, 1
        %s263 = smul.addr %s262, 16
        %s264 = scalar_lea.vmem [#allocation2], %s263
        // Predicated region
        $region29: #{tpu_custom_call.1} parent=27 // pred_check
          %p265 = pneg %p58
        $region30: #{tpu_custom_call.1} parent=27 // pred_check_branch
          %267 = sbr.rel (%p265) target = $region32
        $region31: #{tpu_custom_call.1} parent=27 // pred_region
          %268 = dma.done %s261, 256
        $region32: #{tpu_custom_call.1} parent=27 // pred_fallthru
          _
        %s269 = sand.u32 %s73, 1
        %s270 = scalar_lea.sflag [#allocation5], %s269
        %s271 = sand.u32 %s73, 1
        %s272 = smul.addr %s271, 16
        %s273 = scalar_lea.vmem [#allocation4], %s272
        // Predicated region
        $region33: #{tpu_custom_call.1} parent=27 // pred_check
          %p274 = pneg %p86
        $region34: #{tpu_custom_call.1} parent=27 // pred_check_branch
          %276 = sbr.rel (%p274) target = $region36
        $region35: #{tpu_custom_call.1} parent=27 // pred_region
          %277 = dma.done %s270, 256
        $region36: #{tpu_custom_call.1} parent=27 // pred_fallthru
          _
        %s278 = sand.u32 %s45, 1
        %s279 = scalar_lea.sflag [#allocation3], %s278
        %s280 = sand.u32 %s45, 1
        %s281 = smul.addr %s280, 16
        %s282 = scalar_lea.vmem [#allocation2], %s281
        %p283 = pneg %p58
        %p284 = pneg %p55
        %s285 = sand.u32 %s73, 1
        %s286 = scalar_lea.sflag [#allocation5], %s285
        %s287 = sand.u32 %s73, 1
        %s288 = smul.addr %s287, 16
        %s289 = scalar_lea.vmem [#allocation4], %s288
        %p290 = pneg %p86
        %p291 = pneg %p83
        %p292 = pneg %p112
        %p293 = pneg %p109
        %s294 = smul.u32 2, %s27
        %p295 = scmp.lt.s32.totalorder %s294, 3
        %s296 = scalar_select %p295, %s294, 3
        %s297 = scalar_lea.vmem %s2, %s296
        %p298 = pneg %p138
        %p299 = pneg %p135
        %s300 = smul.u32 2, %s27
        %p301 = scmp.lt.s32.totalorder %s300, 3
        %s302 = scalar_select %p301, %s300, 3
        %s303 = scalar_lea.vmem %s3, %s302
        %p304 = pneg %p164
        %p305 = pneg %p161
        %s306 = smul.u32 2, %s27
        %p307 = scmp.lt.s32.totalorder %s306, 3
        %s308 = scalar_select %p307, %s306, 3
        %s309 = scalar_lea.vmem %s4, %s308
        %p310 = pneg %p190
        %p311 = pneg %p187
        %s312 = smul.u32 2, %s27
        %p313 = scmp.lt.s32.totalorder %s312, 3
        %s314 = scalar_select %p313, %s312, 3
        %s315 = scalar_lea.vmem %s5, %s314
        %s316 = smul.u32 2, %s27
        %s317 = smul.u32 2, %s27
        %s318 = smul.u32 2, %s27
        %p319 = scmp.lt.s32.totalorder %s318, 3
        %s320 = scalar_select %p319, %s318, 3
        %s321 = scalar_lea.vmem %s2, %s320
        %s322 = smul.u32 2, %s27
        %s323 = smul.u32 2, %s27
        %p324 = scmp.lt.s32.totalorder %s323, 3
        %s325 = scalar_select %p324, %s323, 3
        %s326 = scalar_lea.vmem %s3, %s325
        %s327 = smul.u32 2, %s27
        %s328 = smul.u32 2, %s27
        %p329 = scmp.lt.s32.totalorder %s328, 3
        %s330 = scalar_select %p329, %s328, 3
        %s331 = scalar_lea.vmem %s4, %s330
        %s332 = smul.u32 2, %s27
        %s333 = smul.u32 2, %s27
        %p334 = scmp.lt.s32.totalorder %s333, 3
        %s335 = scalar_select %p334, %s333, 3
        %s336 = scalar_lea.vmem %s5, %s335
        %s337 = smul.u32 2, %s27
        %p338 = scmp.eq.s32.totalorder %s28, 0
        // Predicated region
        $region37: #{tpu_custom_call.1} parent=27 // pred_check
          %p339 = pneg %p338
        $region38: #{tpu_custom_call.1} parent=27 // pred_check_branch
          %341 = sbr.rel (%p339) target = $region40
        $region39: #{tpu_custom_call.1} parent=27 // pred_region
          %vm342 = vcmask 0
          %343 = vst.msk [vmem:[%s321] sm:$0x1] %vm342, 0.0
          %344 = vst.msk [vmem:[%s321 + $0x1] sm:$0x1] %vm342, 0.0
          %345 = vst.msk [vmem:[%s326] sm:$0x1] %vm342, 0.0
          %346 = vst.msk [vmem:[%s326 + $0x1] sm:$0x1] %vm342, 0.0
          %347 = vst.msk [vmem:[%s331] sm:$0x1] %vm342, 0.0
          %348 = vst.msk [vmem:[%s331 + $0x1] sm:$0x1] %vm342, 0.0
          %349 = vst.msk [vmem:[%s336] sm:$0x1] %vm342, 0.0
          %350 = vst.msk [vmem:[%s336 + $0x1] sm:$0x1] %vm342, 0.0
        $region40: #{tpu_custom_call.1} parent=27 // pred_fallthru
          _
        %v351 = vld [vmem:[%s264] sm:$0xff]
        %v352 = vld [vmem:[%s264 + $0x8] sm:$0xff]
        %v353 = vmax.f32 %v351, 1e-07
        %v354 = vmax.f32 %v352, 1e-07
        %v355 = vmin.f32 %v353, 0.9999999
        %v356 = vmin.f32 %v354, 0.9999999
        %v357 = vld [vmem:[%s273] sm:$0xff]
        %v358 = vld [vmem:[%s273 + $0x8] sm:$0xff]
        %v359 = vsub.f32 1.0, %v355
        %v360 = vsub.f32 1.0, %v356
        %v361 = vrsqrt.pop %v359
        %v362 = vmul.f32 %v359, %v361
        %vm363 = vcmp.eq.f32.partialorder %v359, inf
        %v364 = vsel %vm363, %v359, %v362
        %vm365 = vcmp.eq.f32.partialorder %v359, 0.0
        %v366 = vand.u32 %v359, 2147483648
        %v367 = vsel %vm365, %v366, %v364
        %v368 = vrsqrt.pop %v360
        %v369 = vmul.f32 %v360, %v368
        %vm370 = vcmp.eq.f32.partialorder %v360, inf
        %v371 = vsel %vm370, %v360, %v369
        %vm372 = vcmp.eq.f32.partialorder %v360, 0.0
        %v373 = vand.u32 %v360, 2147483648
        %v374 = vsel %vm372, %v373, %v371
        %v375 = vmul.f32 %v357, %v355
        %v376 = vmul.f32 %v358, %v356
        %v377 = vlog2.pop %v355
        %v378 = vmul.f32 %v377, 0.6931472
        %v379 = vlog2.pop %v356
        %v380 = vmul.f32 %v379, 0.6931472
        %v381 = vmul.f32 %v357, %v378
        %v382 = vmul.f32 %v358, %v380
        %v383 = vmul.f32 %v367, %v381
        %v384 = vmul.f32 %v374, %v382
        %v385 = vlaneseq
        %v386 = vshrl.u32 %v385, 7
        %v387 = vlaneseq
        %v388 = vand.u32 %v387, 127
        %v389 = vmul.u32 %v386, 128
        %v390 = vadd.s32 %v389, %v388
        %vm391 = vcmp.lt.s32.totalorder %v390, 256
        %v392 = vsel %vm391, %v375, 0.0
        %v393 = vsel %vm391, %v376, 0.0
        %v394 = vsel %vm391, %v383, 0.0
        %v395 = vsel %vm391, %v384, 0.0
        %v396 = vsel %vm391, %v357, 0.0
        %v397 = vsel %vm391, %v358, 0.0
        %v398 = vsel %vm391, %v355, 0.0
        %v399 = vsel %vm391, %v356, 0.0
        %v400 = vld [vmem:[%s321] sm:$0x1]
        %v401 = vld [vmem:[%s321 + $0x1] sm:$0x1]
        %v402 = vrot.slane %v392, 4
        %v403 = vadd.f32 %v392, %v402
        %v404 = vrot.slane %v403, 2
        %v405 = vadd.f32 %v403, %v404
        %v406 = vrot.slane %v405, 1
        %v407 = vadd.f32 %v405, %v406
        %v408 = vrot.slane %v393, 4
        %v409 = vadd.f32 %v393, %v408
        %v410 = vrot.slane %v409, 2
        %v411 = vadd.f32 %v409, %v410
        %v412 = vrot.slane %v411, 1
        %v413 = vadd.f32 %v411, %v412
        %414 = vadd.xlane.f32.xlu0 %v407
        %v415 = vpop.xlane.xlu0 %414
        %416 = vadd.xlane.f32.xlu0 %v413
        %v417 = vpop.xlane.xlu0 %416
        %v418 = vadd.f32 %v400, %v415
        %v419 = vadd.f32 %v401, %v417
        %vm420 = vcmask 0
        %421 = vst.msk [vmem:[%s321] sm:$0x1] %vm420, %v418
        %422 = vst.msk [vmem:[%s321 + $0x1] sm:$0x1] %vm420, %v419
        %v423 = vld [vmem:[%s326] sm:$0x1]
        %v424 = vld [vmem:[%s326 + $0x1] sm:$0x1]
        %v425 = vrot.slane %v396, 4
        %v426 = vadd.f32 %v396, %v425
        %v427 = vrot.slane %v426, 2
        %v428 = vadd.f32 %v426, %v427
        %v429 = vrot.slane %v428, 1
        %v430 = vadd.f32 %v428, %v429
        %v431 = vrot.slane %v397, 4
        %v432 = vadd.f32 %v397, %v431
        %v433 = vrot.slane %v432, 2
        %v434 = vadd.f32 %v432, %v433
        %v435 = vrot.slane %v434, 1
        %v436 = vadd.f32 %v434, %v435
        %437 = vadd.xlane.f32.xlu0 %v430
        %v438 = vpop.xlane.xlu0 %437
        %439 = vadd.xlane.f32.xlu0 %v436
        %v440 = vpop.xlane.xlu0 %439
        %v441 = vadd.f32 %v423, %v438
        %v442 = vadd.f32 %v424, %v440
        %443 = vst.msk [vmem:[%s326] sm:$0x1] %vm420, %v441
        %444 = vst.msk [vmem:[%s326 + $0x1] sm:$0x1] %vm420, %v442
        %v445 = vld [vmem:[%s331] sm:$0x1]
        %v446 = vld [vmem:[%s331 + $0x1] sm:$0x1]
        %v447 = vrot.slane %v398, 4
        %v448 = vadd.f32 %v398, %v447
        %v449 = vrot.slane %v448, 2
        %v450 = vadd.f32 %v448, %v449
        %v451 = vrot.slane %v450, 1
        %v452 = vadd.f32 %v450, %v451
        %v453 = vrot.slane %v399, 4
        %v454 = vadd.f32 %v399, %v453
        %v455 = vrot.slane %v454, 2
        %v456 = vadd.f32 %v454, %v455
        %v457 = vrot.slane %v456, 1
        %v458 = vadd.f32 %v456, %v457
        %459 = vadd.xlane.f32.xlu0 %v452
        %v460 = vpop.xlane.xlu0 %459
        %461 = vadd.xlane.f32.xlu0 %v458
        %v462 = vpop.xlane.xlu0 %461
        %v463 = vadd.f32 %v445, %v460
        %v464 = vadd.f32 %v446, %v462
        %465 = vst.msk [vmem:[%s331] sm:$0x1] %vm420, %v463
        %466 = vst.msk [vmem:[%s331 + $0x1] sm:$0x1] %vm420, %v464
        %v467 = vld [vmem:[%s336] sm:$0x1]
        %v468 = vld [vmem:[%s336 + $0x1] sm:$0x1]
        %v469 = vrot.slane %v394, 4
        %v470 = vadd.f32 %v394, %v469
        %v471 = vrot.slane %v470, 2
        %v472 = vadd.f32 %v470, %v471
        %v473 = vrot.slane %v472, 1
        %v474 = vadd.f32 %v472, %v473
        %v475 = vrot.slane %v395, 4
        %v476 = vadd.f32 %v395, %v475
        %v477 = vrot.slane %v476, 2
        %v478 = vadd.f32 %v476, %v477
        %v479 = vrot.slane %v478, 1
        %v480 = vadd.f32 %v478, %v479
        %481 = vadd.xlane.f32.xlu0 %v474
        %v482 = vpop.xlane.xlu0 %481
        %483 = vadd.xlane.f32.xlu0 %v480
        %v484 = vpop.xlane.xlu0 %483
        %v485 = vadd.f32 %v467, %v482
        %v486 = vadd.f32 %v468, %v484
        %487 = vst.msk [vmem:[%s336] sm:$0x1] %vm420, %v485
        %488 = vst.msk [vmem:[%s336 + $0x1] sm:$0x1] %vm420, %v486
        %s489 = smul.u32 2, %s27
        %p490 = scmp.lt.s32.totalorder %s489, 3
        %s491 = scalar_select %p490, %s489, 3
        %s492 = scalar_lea.vmem %s2, %s491
        %s493 = smul.u32 2, %s27
        %p494 = scmp.lt.s32.totalorder %s493, 3
        %s495 = scalar_select %p494, %s493, 3
        %s496 = scalar_lea.vmem %s3, %s495
        %s497 = smul.u32 2, %s27
        %p498 = scmp.lt.s32.totalorder %s497, 3
        %s499 = scalar_select %p498, %s497, 3
        %s500 = scalar_lea.vmem %s4, %s499
        %s501 = smul.u32 2, %s27
        %p502 = scmp.lt.s32.totalorder %s501, 3
        %s503 = scalar_select %p502, %s501, 3
        %s504 = scalar_lea.vmem %s5, %s503
        // Predicated region
        $region41: #{tpu_custom_call.1} parent=27 // pred_check
          %p505 = pneg %p109
        $region42: #{tpu_custom_call.1} parent=27 // pred_check_branch
          %507 = sbr.rel (%p505) target = $region44
        $region43: #{tpu_custom_call.1} parent=27 // pred_region
          %s508 = smul.u32 2, %s27
        $region44: #{tpu_custom_call.1} parent=27 // pred_fallthru
          _
        // Predicated region
        $region45: #{tpu_custom_call.1} parent=27 // pred_check
          %p509 = pneg %p135
        $region46: #{tpu_custom_call.1} parent=27 // pred_check_branch
          %511 = sbr.rel (%p509) target = $region48
        $region47: #{tpu_custom_call.1} parent=27 // pred_region
          %s512 = smul.u32 2, %s27
        $region48: #{tpu_custom_call.1} parent=27 // pred_fallthru
          _
        // Predicated region
        $region49: #{tpu_custom_call.1} parent=27 // pred_check
          %p513 = pneg %p161
        $region50: #{tpu_custom_call.1} parent=27 // pred_check_branch
          %515 = sbr.rel (%p513) target = $region52
        $region51: #{tpu_custom_call.1} parent=27 // pred_region
          %s516 = smul.u32 2, %s27
        $region52: #{tpu_custom_call.1} parent=27 // pred_fallthru
          _
        // Predicated region
        $region53: #{tpu_custom_call.1} parent=27 // pred_check
          %p517 = pneg %p187
        $region54: #{tpu_custom_call.1} parent=27 // pred_check_branch
          %519 = sbr.rel (%p517) target = $region56
        $region55: #{tpu_custom_call.1} parent=27 // pred_region
          %s520 = smul.u32 2, %s27
        $region56: #{tpu_custom_call.1} parent=27 // pred_fallthru
          _
      $region28: #{tpu_custom_call.1} parent=5 // pred_fallthru
        _
      %p521 = scmp.le.s32.totalorder 2, %s18
      // Predicated region
      $region57: #{tpu_custom_call.1} parent=5 // pred_check
        %p522 = pneg %p521
      $region58: #{tpu_custom_call.1} parent=5 // pred_check_branch
        %524 = sbr.rel (%p522) target = $region60
      $region59: #{tpu_custom_call.1} parent=5 // pred_region
        %s525 = ssub.s32 %s18, 2
        // Predicated region
        $region61: #{tpu_custom_call.1} parent=59 // pred_check
          %p526 = pneg %p115
        $region62: #{tpu_custom_call.1} parent=59 // pred_check_branch
          %528 = sbr.rel (%p526) target = $region64
        $region63: #{tpu_custom_call.1} parent=59 // pred_region
          %s529 = smul.u32 2, %s29
          %p530 = scmp.lt.s32.totalorder %s529, 3
          %s531 = scalar_select %p530, %s529, 3
          %s532 = scalar_lea.vmem %s2, %s531
        $region64: #{tpu_custom_call.1} parent=59 // pred_fallthru
          _
        // Predicated region
        $region65: #{tpu_custom_call.1} parent=59 // pred_check
          %p533 = pneg %p141
        $region66: #{tpu_custom_call.1} parent=59 // pred_check_branch
          %535 = sbr.rel (%p533) target = $region68
        $region67: #{tpu_custom_call.1} parent=59 // pred_region
          %s536 = smul.u32 2, %s29
          %p537 = scmp.lt.s32.totalorder %s536, 3
          %s538 = scalar_select %p537, %s536, 3
          %s539 = scalar_lea.vmem %s3, %s538
        $region68: #{tpu_custom_call.1} parent=59 // pred_fallthru
          _
        // Predicated region
        $region69: #{tpu_custom_call.1} parent=59 // pred_check
          %p540 = pneg %p167
        $region70: #{tpu_custom_call.1} parent=59 // pred_check_branch
          %542 = sbr.rel (%p540) target = $region72
        $region71: #{tpu_custom_call.1} parent=59 // pred_region
          %s543 = smul.u32 2, %s29
          %p544 = scmp.lt.s32.totalorder %s543, 3
          %s545 = scalar_select %p544, %s543, 3
          %s546 = scalar_lea.vmem %s4, %s545
        $region72: #{tpu_custom_call.1} parent=59 // pred_fallthru
          _
        // Predicated region
        $region73: #{tpu_custom_call.1} parent=59 // pred_check
          %p547 = pneg %p193
        $region74: #{tpu_custom_call.1} parent=59 // pred_check_branch
          %549 = sbr.rel (%p547) target = $region76
        $region75: #{tpu_custom_call.1} parent=59 // pred_region
          %s550 = smul.u32 2, %s29
          %p551 = scmp.lt.s32.totalorder %s550, 3
          %s552 = scalar_select %p551, %s550, 3
          %s553 = scalar_lea.vmem %s5, %s552
        $region76: #{tpu_custom_call.1} parent=59 // pred_fallthru
          _
      $region60: #{tpu_custom_call.1} parent=5 // pred_fallthru
        _
    $region6: #{tpu_custom_call.1} parent=1 // loop_footer
      %s22 = sadd.s32 1, %s18
    $region7: #{tpu_custom_call.1} parent=1 // loop_footer_branch
      %17 = sbr.rel target = $region3
    $region8: #{tpu_custom_call.1} parent=1 // loop_exit
      _
    %554 = vsyncpa [#allocation3], 1
    %s555 = scalar_lea.sflag [#allocation3], 1
    %556 = vsyncpa %s555, 1
    %557 = vsyncpa [#allocation5], 1
    %s558 = scalar_lea.sflag [#allocation5], 1
    %559 = vsyncpa %s558, 1

</llo_original>
